<compile_context>
chip_gen: v5e
topology: v5e:2x2
jax: 0.10.0
libtpu: 0.0.40
codegen_flags: <defaults>
</compile_context>

<pallas_src>
import functools

import numpy as np
import jax
import jax.numpy as jnp
from jax.experimental import pallas as pl
from jax.experimental.pallas import tpu as pltpu

EPS = 1e-5      # PyTorch BatchNorm2d default eps
LANE = 128      # TPU lane width; channel dims padded to this


def _round_up(x, m):
    return (x + m - 1) // m * m


def _tpu_defaults():
    """Per-generation knobs: (tm rows for 1x1 matmuls, vmem_limit_bytes)."""
    try:
        info = pltpu.get_tpu_info()
        vmem_cap = int(getattr(info, "vmem_capacity_bytes", 128 * 1024 * 1024))
    except Exception:
        vmem_cap = 128 * 1024 * 1024
    if vmem_cap >= 96 * 1024 * 1024:          # v5e / v6e: 128 MiB physical VMEM
        return 512, 64 * 1024 * 1024
    return 256, 40 * 1024 * 1024              # v7x: 64 MiB physical VMEM


def _resident(block_shape, index_map):
    """Single-buffered BlockSpec for operands identical on every grid step."""
    try:
        return pl.BlockSpec(block_shape, index_map, pipeline_mode=pl.Buffered(1))
    except Exception:
        return pl.BlockSpec(block_shape, index_map)


# ----------------------------- Pallas kernels ---------------------------------

def _mm_bn_kernel(*refs, n_branches, has_res, apply_relu):
    """out = relu( sum_i (x_i @ w_i) * s_i + b_i  [+ residual] ), f32 accumulate."""
    o_ref = refs[-1]
    res_ref = refs[-2] if has_res else None
    acc = None
    for br in range(n_branches):
        x_ref, w_ref, s_ref, b_ref = refs[4 * br: 4 * br + 4]
        part = jnp.dot(x_ref[...], w_ref[...], preferred_element_type=jnp.float32)
        part = part * s_ref[...] + b_ref[...]          # folded BN + conv bias
        acc = part if acc is None else acc + part
    if has_res:
        acc = acc + res_ref[...].astype(jnp.float32)
    if apply_relu:
        acc = jnp.maximum(acc, 0.0)
    o_ref[...] = acc.astype(o_ref.dtype)


def fused_matmul_bn(branches, residual=None, apply_relu=True,
                    out_dtype=jnp.bfloat16, tm=256, vmem_limit=None):
    """Sum of fused (M,K_i)@(K_i,N) matmuls, each with folded BN scale/bias,
    optional residual add and ReLU, tiled over the M (= N*Ho*Wo) axis.
    The last partial M block (if any) is masked on store by Pallas."""
    M = branches[0][0].shape[0]
    N = branches[0][1].shape[1]
    tm_eff = min(tm, _round_up(M, LANE))
    grid = (pl.cdiv(M, tm_eff),)

    in_specs, args = [], []
    for x2d, w, s, b in branches:
        K = x2d.shape[1]
        in_specs += [
            pl.BlockSpec((tm_eff, K), lambda i: (i, 0)),   # activation rows (bf16)
            _resident((K, N), lambda i: (0, 0)),           # weight: single-buffered
            _resident((1, N), lambda i: (0, 0)),           # folded BN scale (f32)
            _resident((1, N), lambda i: (0, 0)),           # folded BN bias  (f32)
        ]
        args += [x2d, w,
                 s.reshape(1, N).astype(jnp.float32),
                 b.reshape(1, N).astype(jnp.float32)]
    if residual is not None:
        in_specs.append(pl.BlockSpec((tm_eff, N), lambda i: (i, 0)))
        args.append(residual)

    kernel = functools.partial(_mm_bn_kernel, n_branches=len(branches),
                               has_res=residual is not None,
                               apply_relu=apply_relu)
    return pl.pallas_call(
        kernel,
        out_shape=jax.ShapeDtypeStruct((M, N), out_dtype),
        grid=grid,
        in_specs=in_specs,
        out_specs=pl.BlockSpec((tm_eff, N), lambda i: (i, 0)),
        compiler_params=pltpu.CompilerParams(
            dimension_semantics=("parallel",),
            vmem_limit_bytes=vmem_limit),
    )(*args)


def _conv3x3_kernel(x_ref, w_ref, s_ref, b_ref, o_ref, acc_ref, *, Ho, Wo, C):
    """3x3 conv (pad=1, stride=1) + folded BN + ReLU for one image.

    Width-wise im2col built in-kernel (no HBM im2col, no HBM halo pad):
    three (Ho*Wo, 3C) @ (3C, C) matmuls (one per kh), accumulated in a f32
    VMEM scratch. Inputs stay bf16 end-to-end; only accumulation is f32."""
    x0 = x_ref[0]                                              # (Ho, Wo, C) bf16
    zc = jnp.zeros((Ho, 1, C), x0.dtype)
    win_l = jnp.concatenate([zc, x0[:, :Wo - 1, :]], axis=1)   # kw = 0 tap input
    win_r = jnp.concatenate([x0[:, 1:, :], zc], axis=1)        # kw = 2 tap input
    xcat = jnp.concatenate([win_l, x0, win_r], axis=2)         # (Ho, Wo, 3C)
    zr = jnp.zeros((1, Wo, 3 * C), x0.dtype)
    xcat = jnp.concatenate([zr, xcat, zr], axis=0)             # (Ho+2, Wo, 3C)

    acc_ref[...] = jnp.zeros_like(acc_ref)
    for kh in range(3):
        win = xcat[kh:kh + Ho].reshape(Ho * Wo, 3 * C)         # bf16, no cast
        acc_ref[...] += jnp.dot(win, w_ref[kh],
                                preferred_element_type=jnp.float32)
    acc = acc_ref[...] * s_ref[...] + b_ref[...]               # folded BN + bias
    acc = jnp.maximum(acc, 0.0)
    o_ref[...] = acc.reshape(1, Ho, Wo, C).astype(o_ref.dtype)


def conv3x3_bn_relu(x, w3c, scale, bias, out_dtype=jnp.bfloat16, vmem_limit=None):
    """x: (N, Ho, Wo, C) NHWC bf16 (unpadded); w3c: (3, 3C, C) bf16 repacked as
    (kh, kw*C + cin, cout)."""
    Nb, Ho, Wo, C = x.shape
    kernel = functools.partial(_conv3x3_kernel, Ho=Ho, Wo=Wo, C=C)
    return pl.pallas_call(
        kernel,
        out_shape=jax.ShapeDtypeStruct((Nb, Ho, Wo, C), out_dtype),
        grid=(Nb,),
        in_specs=[
            pl.BlockSpec((1, Ho, Wo, C), lambda n: (n, 0, 0, 0)),
            _resident((3, 3 * C, C), lambda n: (0, 0, 0)),     # weight resident
            _resident((1, C), lambda n: (0, 0)),
            _resident((1, C), lambda n: (0, 0)),
        ],
        out_specs=pl.BlockSpec((1, Ho, Wo, C), lambda n: (n, 0, 0, 0)),
        scratch_shapes=[pltpu.VMEM((Ho * Wo, C), jnp.float32)],
        compiler_params=pltpu.CompilerParams(
            dimension_semantics=("parallel",),
            vmem_limit_bytes=vmem_limit),
    )(x, w3c, scale.reshape(1, C).astype(jnp.float32),
      bias.reshape(1, C).astype(jnp.float32))


# ------------------------------- JAX glue -------------------------------------

def fold_bn(conv_bias, bn_params):
    """Fold conv bias + eval-mode BatchNorm into per-channel (scale, bias)."""
    gamma, beta, mean, var = bn_params
    scale = gamma / jnp.sqrt(var + EPS)
    bias = beta + (conv_bias - mean) * scale
    return scale, bias


def _pad_mat(w, rows, cols):
    r, c = w.shape
    return jnp.pad(w, ((0, rows - r), (0, cols - c)))


def _pad_vec(v, n):
    return jnp.pad(v, (0, n - v.shape[0]))


def bottleneck_forward(x_nchw, params, stride, tm=None, vmem_limit=None):
    """Pallas implementation of BottleNeck.forward (bn=True, res_connection=True)."""
    if tm is None or vmem_limit is None:
        d_tm, d_vmem = _tpu_defaults()
        tm = tm or d_tm
        vmem_limit = vmem_limit or d_vmem

    x = jnp.transpose(x_nchw, (0, 2, 3, 1))             # NCHW -> NHWC (glue)
    Nb, H, W, Cin = x.shape
    mid = params["w1"].shape[1]
    Cout = params["w3"].shape[1]
    Cin_p, Cm_p, Co_p = (_round_up(c, LANE) for c in (Cin, mid, Cout))

    # Fold BN + conv bias; pad per-channel params to lane width (pads -> 0).
    s1, b1 = fold_bn(params["b1"], params["bn1"])
    s2, b2 = fold_bn(params["b2"], params["bn2"])
    s3, b3 = fold_bn(params["b3"], params["bn3"])
    s1, b1 = _pad_vec(s1, Cm_p), _pad_vec(b1, Cm_p)
    s2, b2 = _pad_vec(s2, Cm_p), _pad_vec(b2, Cm_p)
    s3, b3 = _pad_vec(s3, Co_p), _pad_vec(b3, Co_p)

    # Channel-padded bf16 weights (lane-dense, native MXU rate).
    w1 = _pad_mat(params["w1"], Cin_p, Cm_p).astype(jnp.bfloat16)
    w3 = _pad_mat(params["w3"], Cm_p, Co_p).astype(jnp.bfloat16)
    # 3x3 weight repacked for width-wise im2col: (kh, kw*C + cin, cout).
    w2 = jnp.pad(params["w2"], ((0, 0), (0, 0), (0, Cm_p - mid), (0, Cm_p - mid)))
    w2 = w2.reshape(3, 3 * Cm_p, Cm_p).astype(jnp.bfloat16)

    # 1x1 conv with stride == spatial subsample + matmul.
    xs = x[:, ::stride, ::stride, :]
    _, Ho, Wo, _ = xs.shape
    M = Nb * Ho * Wo
    xs2d = jnp.pad(xs, ((0, 0), (0, 0), (0, 0), (0, Cin_p - Cin))
                   ).reshape(M, Cin_p).astype(jnp.bfloat16)

    # conv1 + bn1 + relu
    h1 = fused_matmul_bn([(xs2d, w1, s1, b1)], apply_relu=True,
                         out_dtype=jnp.bfloat16, tm=tm, vmem_limit=vmem_limit)
    h1_img = h1.reshape(Nb, Ho, Wo, Cm_p)

    # conv2 (3x3, pad=1) + bn2 + relu — halo handled in-kernel, no HBM pad
    h2 = conv3x3_bn_relu(h1_img, w2, s2, b2, out_dtype=jnp.bfloat16,
                         vmem_limit=vmem_limit)
    h2_2d = h2.reshape(M, Cm_p)

    # conv3 + bn3 + residual branch + relu, all in one kernel
    if "w_ds" in params:   # downsample 1x1 conv + bn_ds fused as a second matmul
        s_ds, b_ds = fold_bn(params["b_ds"], params["bn_ds"])
        w_ds = _pad_mat(params["w_ds"], Cin_p, Co_p).astype(jnp.bfloat16)
        branches = [(h2_2d, w3, s3, b3),
                    (xs2d, w_ds, _pad_vec(s_ds, Co_p), _pad_vec(b_ds, Co_p))]
        h3 = fused_matmul_bn(branches, apply_relu=True,
                             out_dtype=jnp.bfloat16, tm=tm, vmem_limit=vmem_limit)
    else:                  # identity residual path
        assert stride == 1 and Cin == Cout, \
            "identity residual requires stride==1 and in_channels==out_channels"
        h3 = fused_matmul_bn([(h2_2d, w3, s3, b3)], residual=xs2d,
                             apply_relu=True, out_dtype=jnp.bfloat16,
                             tm=tm, vmem_limit=vmem_limit)

    out = h3[:, :Cout].reshape(Nb, Ho, Wo, Cout).astype(jnp.float32)
    return jnp.transpose(out, (0, 3, 1, 2))              # NHWC -> NCHW (glue)


# ---------------------------- pure-JAX reference -------------------------------

def ref_forward(x_nchw, params, stride):
    x = jnp.transpose(x_nchw, (0, 2, 3, 1))
    dn = ("NHWC", "HWIO", "NHWC")

    def conv(inp, w_hwio, b, strides, padding):
        y = jax.lax.conv_general_dilated(inp, w_hwio, strides, padding,
                                         dimension_numbers=dn,
                                         precision=jax.lax.Precision.HIGHEST)
        return y + b

    def bn(y, p):
        gamma, beta, mean, var = p
        return (y - mean) / jnp.sqrt(var + EPS) * gamma + beta

    Cin, mid = params["w1"].shape
    Cout = params["w3"].shape[1]
    w1 = params["w1"].reshape(1, 1, Cin, mid)
    w3 = params["w3"].reshape(1, 1, mid, Cout)
    w_ds = params["w_ds"].reshape(1, 1, Cin, Cout)

    h1 = jnp.maximum(bn(conv(x, w1, params["b1"], (stride, stride), "VALID"),
                        params["bn1"]), 0.0)
    h2 = jnp.maximum(bn(conv(h1, params["w2"], params["b2"], (1, 1),
                             [(1, 1), (1, 1)]), params["bn2"]), 0.0)
    h3 = bn(conv(h2, w3, params["b3"], (1, 1), "VALID"), params["bn3"])
    res = bn(conv(x, w_ds, params["b_ds"], (stride, stride), "VALID"),
             params["bn_ds"])
    out = jnp.maximum(h3 + res, 0.0)
    return jnp.transpose(out, (0, 3, 1, 2))


# ---------------------------------- main ---------------------------------------

def make_params(key, Cin, Cout):
    mid = Cout // 4
    ks = jax.random.split(key, 24)

    def nrm(k, shape, s=0.1):
        return s * jax.random.normal(k, shape, dtype=jnp.float32)

    def bn_p(k0, k1, k2, k3, c):
        gamma = 1.0 + nrm(k0, (c,))
        beta = nrm(k1, (c,))
        mean = nrm(k2, (c,))
        var = 1.0 + jnp.abs(nrm(k3, (c,)))  # strictly positive running_var
        return (gamma, beta, mean, var)

    return {
        # torch conv1.weight (mid, Cin, 1, 1) -> (Cin, mid)
        "w1": nrm(ks[0], (Cin, mid)), "b1": nrm(ks[1], (mid,)),
        # torch conv2.weight (mid, mid, 3, 3) -> HWIO (3, 3, mid, mid)
        "w2": nrm(ks[2], (3, 3, mid, mid)), "b2": nrm(ks[3], (mid,)),
        # torch conv3.weight (Cout, mid, 1, 1) -> (mid, Cout)
        "w3": nrm(ks[4], (mid, Cout)), "b3": nrm(ks[5], (Cout,)),
        # torch downsample.weight (Cout, Cin, 1, 1) -> (Cin, Cout)
        "w_ds": nrm(ks[6], (Cin, Cout)), "b_ds": nrm(ks[7], (Cout,)),
        "bn1": bn_p(ks[8], ks[9], ks[10], ks[11], mid),
        "bn2": bn_p(ks[12], ks[13], ks[14], ks[15], mid),
        "bn3": bn_p(ks[16], ks[17], ks[18], ks[19], Cout),
        "bn_ds": bn_p(ks[20], ks[21], ks[22], ks[23], Cout),
    }


if __name__ == "__main__":
    # Small shapes: batch=2, in_channels=8, out_channels=16, spatial=16, stride=2.
    N, Cin, H, W = 2, 8, 16, 16
    Cout, stride = 16, 2

    key = jax.random.PRNGKey(0)
    kx, kp = jax.random.split(key)
    x = jax.random.normal(kx, (N, Cin, H, W), dtype=jnp.float32)  # NCHW, like torch
    params = make_params(kp, Cin, Cout)

    out = jax.block_until_ready(bottleneck_forward(x, params, stride))
    ref = jax.block_until_ready(ref_forward(x, params, stride))

    assert out.shape == (N, Cout, H // stride, W // stride), out.shape
    # bf16 activations/weights with f32 accumulation -> loosened tolerance.
    np.testing.assert_allclose(np.asarray(out), np.asarray(ref),
                               rtol=3e-2, atol=3e-2)
    print("KERNEL_OK")
</pallas_src>

<mosaic_0001>
module attributes {stable_mosaic.version = 11 : i64} {
  func.func @_mm_bn_kernel(%arg0: i32, %arg1: memref<128x128xbf16, #tpu.memory_space<vmem>>, %arg2: memref<128x128xbf16, #tpu.memory_space<vmem>>, %arg3: memref<1x128xf32, #tpu.memory_space<vmem>>, %arg4: memref<1x128xf32, #tpu.memory_space<vmem>>, %arg5: memref<128x128xbf16, #tpu.memory_space<vmem>>) attributes {dimension_semantics = [#tpu.dimension_semantics<parallel>], iteration_bounds = array<i64: 1>, scalar_prefetch = 0 : i64, scratch_operands = 0 : i64, tpu.core_type = #tpu.core_type<tc>, window_params = [{transform_indices = @transform_0, window_bounds = array<i64: 128, 128>}, {pipeline_mode = #tpu.pipeline_mode<synchronous>, transform_indices = @transform_1, window_bounds = array<i64: 128, 128>}, {pipeline_mode = #tpu.pipeline_mode<synchronous>, transform_indices = @transform_2, window_bounds = array<i64: 1, 128>}, {pipeline_mode = #tpu.pipeline_mode<synchronous>, transform_indices = @transform_3, window_bounds = array<i64: 1, 128>}, {transform_indices = @transform_4, window_bounds = array<i64: 128, 128>}]} {
    %c0 = arith.constant 0 : index
    %c0_0 = arith.constant 0 : index
    %0 = vector.load %arg1[%c0, %c0_0] : memref<128x128xbf16, #tpu.memory_space<vmem>>, vector<128x128xbf16>
    %c0_1 = arith.constant 0 : index
    %c0_2 = arith.constant 0 : index
    %1 = vector.load %arg2[%c0_1, %c0_2] : memref<128x128xbf16, #tpu.memory_space<vmem>>, vector<128x128xbf16>
    %cst = arith.constant dense<0.000000e+00> : vector<128x128xf32>
    %2 = tpu.matmul %0, %1, %cst {dimension_numbers = #tpu.dot_dimension_numbers<[1], [0], [0], [1], [0, 0, 1, 1], [], []>} : vector<128x128xbf16>, vector<128x128xbf16>, vector<128x128xf32> -> vector<128x128xf32>
    %c0_3 = arith.constant 0 : index
    %c0_4 = arith.constant 0 : index
    %3 = vector.load %arg3[%c0_3, %c0_4] : memref<1x128xf32, #tpu.memory_space<vmem>>, vector<1x128xf32>
    %4 = vector.broadcast %3 : vector<1x128xf32> to vector<128x128xf32>
    %5 = arith.mulf %2, %4 : vector<128x128xf32>
    %c0_5 = arith.constant 0 : index
    %c0_6 = arith.constant 0 : index
    %6 = vector.load %arg4[%c0_5, %c0_6] : memref<1x128xf32, #tpu.memory_space<vmem>>, vector<1x128xf32>
    %7 = vector.broadcast %6 : vector<1x128xf32> to vector<128x128xf32>
    %8 = arith.addf %5, %7 : vector<128x128xf32>
    %cst_7 = arith.constant 0.000000e+00 : f32
    %9 = vector.broadcast %cst_7 : f32 to vector<128x128xf32>
    %10 = arith.maximumf %8, %9 : vector<128x128xf32>
    %11 = arith.truncf %10 : vector<128x128xf32> to vector<128x128xbf16>
    %c0_8 = arith.constant 0 : index
    %c0_9 = arith.constant 0 : index
    %12 = vector.load %arg5[%c0_8, %c0_9] : memref<128x128xbf16, #tpu.memory_space<vmem>>, vector<128x128xbf16>
    tpu.vector_store %arg5[%c0_8, %c0_9], %11 {strides = array<i32>} : memref<128x128xbf16, #tpu.memory_space<vmem>>, vector<128x128xbf16>,
    return
  }
  func.func @transform_0(%arg0: i32) -> (i32, i32) {
    %c0_i32 = arith.constant 0 : i32
    %c0_i32_0 = arith.constant 0 : i32
    return %arg0, %c0_i32 : i32, i32
  }
  func.func @transform_1(%arg0: i32) -> (i32, i32) {
    %c0_i32 = arith.constant 0 : i32
    %c0_i32_0 = arith.constant 0 : i32
    %c0_i32_1 = arith.constant 0 : i32
    return %c0_i32, %c0_i32_0 : i32, i32
  }
  func.func @transform_2(%arg0: i32) -> (i32, i32) {
    %c0_i32 = arith.constant 0 : i32
    %c0_i32_0 = arith.constant 0 : i32
    %c0_i32_1 = arith.constant 0 : i32
    return %c0_i32, %c0_i32_0 : i32, i32
  }
  func.func @transform_3(%arg0: i32) -> (i32, i32) {
    %c0_i32 = arith.constant 0 : i32
    %c0_i32_0 = arith.constant 0 : i32
    %c0_i32_1 = arith.constant 0 : i32
    return %c0_i32, %c0_i32_0 : i32, i32
  }
  func.func @transform_4(%arg0: i32) -> (i32, i32) {
    %c0_i32 = arith.constant 0 : i32
    %c0_i32_0 = arith.constant 0 : i32
    return %arg0, %c0_i32 : i32, i32
  }
}

</mosaic_0001>

<llo_original>
// kernel: tpu_custom_call.1
$region0: #{tpu_custom_call.1}
  #allocation0 [shape = 'u32[]', space=smem, size = 0x4, offset = 0x4, fixed_abs, tag = 'smem constant byte address 0x4 - core index']
  #allocation1 [shape = 'u32[72,128]{1,0:T(1,128)}', space=vmem, size = 0x9000, scoped, tag = 'internal scratch']
  %s0 = inlined_call_operand.hbm [shape: bf16[128,128], index: 0, kind: input, shape index: {}]
  %s1 = inlined_call_operand.hbm [shape: bf16[128,128], index: 1, kind: input, shape index: {}]
  %s2 = inlined_call_operand.vmem [shape: f32[1,128], index: 2, kind: input, shape index: {}]
  %s3 = inlined_call_operand.vmem [shape: f32[1,128], index: 3, kind: input, shape index: {}]
  %s4 = inlined_call_operand.hbm [shape: bf16[128,128], index: 4, kind: output, shape index: {}]
  %s5 = sld [smem:[#allocation0]]
  $region34: #{tpu_custom_call.1} parent=0
    _
  %s7 = ssub.s32 1, %s5
  %s8 = scalar_select 0, %s7, %s5
  $region1: #{tpu_custom_call.1} parent=0
    #allocation2 [shape = 'u8[32768]{0}', space=vmem, size = 0x8000, scoped, tag = 'input window, operand 0, single buffered']
    #allocation3 [shape = 's32[1]{0}', space=sflag, size = 0x4, scoped, tag = 'scoped memory for tpu_custom_call.1']
    #allocation4 [shape = 's32[1]{0}', space=sflag, size = 0x4, scoped, tag = 'scoped memory for tpu_custom_call.1']
    #allocation5 [shape = 'u8[32768]{0}', space=vmem, size = 0x8000, scoped, tag = 'input window, operand 1, single buffered']
    #allocation6 [shape = 's32[1]{0}', space=sflag, size = 0x4, scoped, tag = 'scoped memory for tpu_custom_call.1']
    #allocation7 [shape = 'u8[32768]{0}', space=vmem, size = 0x8000, scoped, tag = 'output window, operand 0, single buffered']
    %9 = vsyncpa [#allocation3], 0
    %10 = vsyncpa [#allocation6], 0
    %11 = vsyncpa [#allocation4], 0
    // Predicated region
    $region2: #{tpu_custom_call.1} parent=1 // pred_check
      _
    $region3: #{tpu_custom_call.1} parent=1 // pred_check_branch
      %13 = sbr.rel (0) target = $region5
    $region4: #{tpu_custom_call.1} parent=1 // pred_region
      %15 = vsyncadd [#allocation3], 0
      %s16 = sshll.u32 %s0, 4
      %s17 = int_to_ptr.hbm [resolvable:$true] %s16
      %s18 = sshll.u32 [#allocation2], 4
      %s19 = int_to_ptr.vmem [resolvable:$true] %s18
      %24 = dma.hbm_to_vmem [thread:$0]  %s17, 1024, %s19, [#allocation3], 64, 64, 4
    $region5: #{tpu_custom_call.1} parent=1 // pred_fallthru
      _
    // Predicated region
    $region6: #{tpu_custom_call.1} parent=1 // pred_check
      _
    $region7: #{tpu_custom_call.1} parent=1 // pred_check_branch
      %26 = sbr.rel (0) target = $region9
    $region8: #{tpu_custom_call.1} parent=1 // pred_region
      %28 = vsyncadd [#allocation6], 0
      %s29 = sshll.u32 %s1, 4
      %s30 = int_to_ptr.hbm [resolvable:$true] %s29
      %s31 = sshll.u32 [#allocation5], 4
      %s32 = int_to_ptr.vmem [resolvable:$true] %s31
      %37 = dma.hbm_to_vmem [thread:$0]  %s30, 1024, %s32, [#allocation6], 64, 64, 4
    $region9: #{tpu_custom_call.1} parent=1 // pred_fallthru
      _
    // Predicated region
    $region10: #{tpu_custom_call.1} parent=1 // pred_check
      _
    $region11: #{tpu_custom_call.1} parent=1 // pred_check_branch
      %39 = sbr.rel (0) target = $region13
    $region12: #{tpu_custom_call.1} parent=1 // pred_region
      _
    $region13: #{tpu_custom_call.1} parent=1 // pred_fallthru
      _
    // Predicated region
    $region14: #{tpu_custom_call.1} parent=1 // pred_check
      _
    $region15: #{tpu_custom_call.1} parent=1 // pred_check_branch
      %41 = sbr.rel (0) target = $region17
    $region16: #{tpu_custom_call.1} parent=1 // pred_region
      _
    $region17: #{tpu_custom_call.1} parent=1 // pred_fallthru
      _
    // Predicated region
    $region18: #{tpu_custom_call.1} parent=1 // pred_check
      _
    $region19: #{tpu_custom_call.1} parent=1 // pred_check_branch
      %43 = sbr.rel (0) target = $region21
    $region20: #{tpu_custom_call.1} parent=1 // pred_region
      %45 = dma.done [#allocation3], 1024
    $region21: #{tpu_custom_call.1} parent=1 // pred_fallthru
      _
    // Predicated region
    $region22: #{tpu_custom_call.1} parent=1 // pred_check
      _
    $region23: #{tpu_custom_call.1} parent=1 // pred_check_branch
      %47 = sbr.rel (0) target = $region25
    $region24: #{tpu_custom_call.1} parent=1 // pred_region
      %49 = dma.done [#allocation6], 1024
    $region25: #{tpu_custom_call.1} parent=1 // pred_fallthru
      _
    %v50 = vld [vmem:[#allocation2] sm:$0xf]
    %v51 = vld [vmem:[#allocation2 + $0x4] sm:$0xf]
    %v52 = vld [vmem:[#allocation2 + $0x8] sm:$0xf]
    %v53 = vld [vmem:[#allocation2 + $0xc] sm:$0xf]
    %v54 = vld [vmem:[#allocation2 + $0x10] sm:$0xf]
    %v55 = vld [vmem:[#allocation2 + $0x14] sm:$0xf]
    %v56 = vld [vmem:[#allocation2 + $0x18] sm:$0xf]
    %v57 = vld [vmem:[#allocation2 + $0x1c] sm:$0xf]
    %v58 = vld [vmem:[#allocation2 + $0x20] sm:$0xf]
    %v59 = vld [vmem:[#allocation2 + $0x24] sm:$0xf]
    %v60 = vld [vmem:[#allocation2 + $0x28] sm:$0xf]
    %v61 = vld [vmem:[#allocation2 + $0x2c] sm:$0xf]
    %v62 = vld [vmem:[#allocation2 + $0x30] sm:$0xf]
    %v63 = vld [vmem:[#allocation2 + $0x34] sm:$0xf]
    %v64 = vld [vmem:[#allocation2 + $0x38] sm:$0xf]
    %v65 = vld [vmem:[#allocation2 + $0x3c] sm:$0xf]
    %v66 = vld [vmem:[#allocation5] sm:$0xf]
    %v67 = vld [vmem:[#allocation5 + $0x4] sm:$0xf]
    %v68 = vld [vmem:[#allocation5 + $0x8] sm:$0xf]
    %v69 = vld [vmem:[#allocation5 + $0xc] sm:$0xf]
    %v70 = vld [vmem:[#allocation5 + $0x10] sm:$0xf]
    %v71 = vld [vmem:[#allocation5 + $0x14] sm:$0xf]
    %v72 = vld [vmem:[#allocation5 + $0x18] sm:$0xf]
    %v73 = vld [vmem:[#allocation5 + $0x1c] sm:$0xf]
    %v74 = vld [vmem:[#allocation5 + $0x20] sm:$0xf]
    %v75 = vld [vmem:[#allocation5 + $0x24] sm:$0xf]
    %v76 = vld [vmem:[#allocation5 + $0x28] sm:$0xf]
    %v77 = vld [vmem:[#allocation5 + $0x2c] sm:$0xf]
    %v78 = vld [vmem:[#allocation5 + $0x30] sm:$0xf]
    %v79 = vld [vmem:[#allocation5 + $0x34] sm:$0xf]
    %v80 = vld [vmem:[#allocation5 + $0x38] sm:$0xf]
    %v81 = vld [vmem:[#allocation5 + $0x3c] sm:$0xf]
    %v98 = vunpack.c.l.b16 %v50
    %v99 = vunpack.c.l.b16 %v51
    %v100 = vunpack.c.l.b16 %v52
    %v101 = vunpack.c.l.b16 %v53
    %v102 = vunpack.c.l.b16 %v54
    %v103 = vunpack.c.l.b16 %v55
    %v104 = vunpack.c.l.b16 %v56
    %v105 = vunpack.c.l.b16 %v57
    %v106 = vunpack.c.l.b16 %v58
    %v107 = vunpack.c.l.b16 %v59
    %v108 = vunpack.c.l.b16 %v60
    %v109 = vunpack.c.l.b16 %v61
    %v110 = vunpack.c.l.b16 %v62
    %v111 = vunpack.c.l.b16 %v63
    %v112 = vunpack.c.l.b16 %v64
    %v113 = vunpack.c.l.b16 %v65
    %v114 = vpack.c.b16 %v99, %v98
    %v115 = vpack.c.b16 %v101, %v100
    %v116 = vpack.c.b16 %v103, %v102
    %v117 = vpack.c.b16 %v105, %v104
    %v118 = vpack.c.b16 %v107, %v106
    %v119 = vpack.c.b16 %v109, %v108
    %v120 = vpack.c.b16 %v111, %v110
    %v121 = vpack.c.b16 %v113, %v112
    %v146 = vunpack.c.l.b16 %v66
    %v147 = vunpack.c.l.b16 %v67
    %v148 = vunpack.c.l.b16 %v68
    %v149 = vunpack.c.l.b16 %v69
    %v150 = vunpack.c.l.b16 %v70
    %v151 = vunpack.c.l.b16 %v71
    %v152 = vunpack.c.l.b16 %v72
    %v153 = vunpack.c.l.b16 %v73
    %v154 = vunpack.c.l.b16 %v74
    %v155 = vunpack.c.l.b16 %v75
    %v156 = vunpack.c.l.b16 %v76
    %v157 = vunpack.c.l.b16 %v77
    %v158 = vunpack.c.l.b16 %v78
    %v159 = vunpack.c.l.b16 %v79
    %v160 = vunpack.c.l.b16 %v80
    %v161 = vunpack.c.l.b16 %v81
    %v162 = vpack.c.b16 %v147, %v146
    %v163 = vpack.c.b16 %v149, %v148
    %v164 = vpack.c.b16 %v151, %v150
    %v165 = vpack.c.b16 %v153, %v152
    %v166 = vpack.c.b16 %v155, %v154
    %v167 = vpack.c.b16 %v157, %v156
    %v168 = vpack.c.b16 %v159, %v158
    %v169 = vpack.c.b16 %v161, %v160
    %178 = vmatpush.bf16.msra.mxu0 %v169
    %179 = vmatpush.bf16.msra.mxu0 %v168
    %180 = vmatpush.bf16.msra.mxu0 %v167
    %181 = vmatpush.bf16.msra.mxu0 %v166
    %182 = vmatpush.bf16.msra.mxu0 %v165
    %183 = vmatpush.bf16.msra.mxu0 %v164
    %184 = vmatpush.bf16.msra.mxu0 %v163
    %185 = vmatpush.bf16.msra.mxu0 %v162
    %186 = vmatmul.bf16.gmra.mxu0 %v114
    %v187 = vpop.f32.mrf.mxu0
    %v188 = vadd.f32 0.0, %v187
    %v189 = vpop.f32.mrf.mxu0
    %v190 = vadd.f32 0.0, %v189
    %191 = vmatmul.bf16.gmra.mxu0 %v115
    %v192 = vpop.f32.mrf.mxu0
    %v193 = vadd.f32 0.0, %v192
    %v194 = vpop.f32.mrf.mxu0
    %v195 = vadd.f32 0.0, %v194
    %196 = vmatmul.bf16.gmra.mxu0 %v116
    %v197 = vpop.f32.mrf.mxu0
    %v198 = vadd.f32 0.0, %v197
    %v199 = vpop.f32.mrf.mxu0
    %v200 = vadd.f32 0.0, %v199
    %201 = vmatmul.bf16.gmra.mxu0 %v117
    %v202 = vpop.f32.mrf.mxu0
    %v203 = vadd.f32 0.0, %v202
    %v204 = vpop.f32.mrf.mxu0
    %v205 = vadd.f32 0.0, %v204
    %206 = vmatmul.bf16.gmra.mxu0 %v118
    %v207 = vpop.f32.mrf.mxu0
    %v208 = vadd.f32 0.0, %v207
    %v209 = vpop.f32.mrf.mxu0
    %v210 = vadd.f32 0.0, %v209
    %211 = vmatmul.bf16.gmra.mxu0 %v119
    %v212 = vpop.f32.mrf.mxu0
    %v213 = vadd.f32 0.0, %v212
    %v214 = vpop.f32.mrf.mxu0
    %v215 = vadd.f32 0.0, %v214
    %216 = vmatmul.bf16.gmra.mxu0 %v120
    %v217 = vpop.f32.mrf.mxu0
    %v218 = vadd.f32 0.0, %v217
    %v219 = vpop.f32.mrf.mxu0
    %v220 = vadd.f32 0.0, %v219
    %221 = vmatmul.bf16.gmra.mxu0 %v121
    %v222 = vpop.f32.mrf.mxu0
    %v223 = vadd.f32 0.0, %v222
    %v224 = vpop.f32.mrf.mxu0
    %v225 = vadd.f32 0.0, %v224
    %226 = vdwg.mxu0
    %v227 = vld [vmem:[%s2] sm:$0x1]
    %v229 = vperm.slane %v227, 0
    %v231 = vmul.f32 %v188, %v229
    %v232 = vmul.f32 %v190, %v229
    %v233 = vmul.f32 %v193, %v229
    %v234 = vmul.f32 %v195, %v229
    %v235 = vmul.f32 %v198, %v229
    %v236 = vmul.f32 %v200, %v229
    %v237 = vmul.f32 %v203, %v229
    %v238 = vmul.f32 %v205, %v229
    %v239 = vmul.f32 %v208, %v229
    %v240 = vmul.f32 %v210, %v229
    %v241 = vmul.f32 %v213, %v229
    %v242 = vmul.f32 %v215, %v229
    %v243 = vmul.f32 %v218, %v229
    %v244 = vmul.f32 %v220, %v229
    %v245 = vmul.f32 %v223, %v229
    %v246 = vmul.f32 %v225, %v229
    %v247 = vld [vmem:[%s3] sm:$0x1]
    %v249 = vperm.slane %v247, 0
    %v251 = vadd.f32 %v231, %v249
    %v252 = vadd.f32 %v232, %v249
    %v253 = vadd.f32 %v233, %v249
    %v254 = vadd.f32 %v234, %v249
    %v255 = vadd.f32 %v235, %v249
    %v256 = vadd.f32 %v236, %v249
    %v257 = vadd.f32 %v237, %v249
    %v258 = vadd.f32 %v238, %v249
    %v259 = vadd.f32 %v239, %v249
    %v260 = vadd.f32 %v240, %v249
    %v261 = vadd.f32 %v241, %v249
    %v262 = vadd.f32 %v242, %v249
    %v263 = vadd.f32 %v243, %v249
    %v264 = vadd.f32 %v244, %v249
    %v265 = vadd.f32 %v245, %v249
    %v266 = vadd.f32 %v246, %v249
    %v267 = vmax.f32 %v251, 0.0
    %v268 = vmax.f32 %v252, 0.0
    %v269 = vmax.f32 %v253, 0.0
    %v270 = vmax.f32 %v254, 0.0
    %v271 = vmax.f32 %v255, 0.0
    %v272 = vmax.f32 %v256, 0.0
    %v273 = vmax.f32 %v257, 0.0
    %v274 = vmax.f32 %v258, 0.0
    %v275 = vmax.f32 %v259, 0.0
    %v276 = vmax.f32 %v260, 0.0
    %v277 = vmax.f32 %v261, 0.0
    %v278 = vmax.f32 %v262, 0.0
    %v279 = vmax.f32 %v263, 0.0
    %v280 = vmax.f32 %v264, 0.0
    %v281 = vmax.f32 %v265, 0.0
    %v282 = vmax.f32 %v266, 0.0
    %v283 = vpack.c.bf16 %v267, %v267
    %v284 = vpack.c.bf16 %v268, %v268
    %v285 = vpack.c.bf16 %v269, %v269
    %v286 = vpack.c.bf16 %v270, %v270
    %v287 = vpack.c.bf16 %v271, %v271
    %v288 = vpack.c.bf16 %v272, %v272
    %v289 = vpack.c.bf16 %v273, %v273
    %v290 = vpack.c.bf16 %v274, %v274
    %v291 = vpack.c.bf16 %v275, %v275
    %v292 = vpack.c.bf16 %v276, %v276
    %v293 = vpack.c.bf16 %v277, %v277
    %v294 = vpack.c.bf16 %v278, %v278
    %v295 = vpack.c.bf16 %v279, %v279
    %v296 = vpack.c.bf16 %v280, %v280
    %v297 = vpack.c.bf16 %v281, %v281
    %v298 = vpack.c.bf16 %v282, %v282
    %299 = vst [vmem:[#allocation7] sm:$0xf] %v283
    %300 = vst [vmem:[#allocation7 + $0x4] sm:$0xf] %v284
    %301 = vst [vmem:[#allocation7 + $0x8] sm:$0xf] %v285
    %302 = vst [vmem:[#allocation7 + $0xc] sm:$0xf] %v286
    %303 = vst [vmem:[#allocation7 + $0x10] sm:$0xf] %v287
    %304 = vst [vmem:[#allocation7 + $0x14] sm:$0xf] %v288
    %305 = vst [vmem:[#allocation7 + $0x18] sm:$0xf] %v289
    %306 = vst [vmem:[#allocation7 + $0x1c] sm:$0xf] %v290
    %307 = vst [vmem:[#allocation7 + $0x20] sm:$0xf] %v291
    %308 = vst [vmem:[#allocation7 + $0x24] sm:$0xf] %v292
    %309 = vst [vmem:[#allocation7 + $0x28] sm:$0xf] %v293
    %310 = vst [vmem:[#allocation7 + $0x2c] sm:$0xf] %v294
    %311 = vst [vmem:[#allocation7 + $0x30] sm:$0xf] %v295
    %312 = vst [vmem:[#allocation7 + $0x34] sm:$0xf] %v296
    %313 = vst [vmem:[#allocation7 + $0x38] sm:$0xf] %v297
    %314 = vst [vmem:[#allocation7 + $0x3c] sm:$0xf] %v298
    // Predicated region
    $region26: #{tpu_custom_call.1} parent=1 // pred_check
      _
    $region27: #{tpu_custom_call.1} parent=1 // pred_check_branch
      %316 = sbr.rel (0) target = $region29
    $region28: #{tpu_custom_call.1} parent=1 // pred_region
      %318 = vsyncadd [#allocation4], 0
      %s319 = sshll.u32 [#allocation7], 4
      %s320 = int_to_ptr.vmem [resolvable:$true] %s319
      %s321 = sshll.u32 %s4, 4
      %s322 = int_to_ptr.hbm [resolvable:$true] %s321
      %327 = dma.vmem_to_hbm [thread:$0]  %s320, 1024, %s322, [#allocation4], 64, 64, 4
    $region29: #{tpu_custom_call.1} parent=1 // pred_fallthru
      _
    // Predicated region
    $region30: #{tpu_custom_call.1} parent=1 // pred_check
      _
    $region31: #{tpu_custom_call.1} parent=1 // pred_check_branch
      %329 = sbr.rel (0) target = $region33
    $region32: #{tpu_custom_call.1} parent=1 // pred_region
      %331 = dma.done [#allocation4], 1024
    $region33: #{tpu_custom_call.1} parent=1 // pred_fallthru
      _
    %332 = vsyncpa [#allocation3], 1
    %333 = vsyncpa [#allocation6], 1
    %334 = vsyncpa [#allocation4], 1

</llo_original>
